<compile_context>
chip_gen: v6e
topology: v6e:2x2x1
jax: 0.10.0
libtpu: 0.0.40
codegen_flags: <defaults>
</compile_context>

<pallas_src>
import jax
import jax.numpy as jnp
from jax.experimental import pallas as pl
from jax.experimental.pallas import tpu as pltpu


def _mlp_softmax_kernel(x_ref, w1_ref, b1_ref, w2_ref, b2_ref, w3_ref, b3_ref, o_ref):
    # Feature-major: x_ref (D_in, TB) f32; w*_ref (out, in) bf16; b*_ref (out, 1) f32;
    # o_ref (n_cls, TB) f32.  Batch lives on the lane axis.
    x_bf = x_ref[...].astype(jnp.bfloat16)
    h = jnp.dot(w1_ref[...], x_bf, preferred_element_type=jnp.float32) + b1_ref[...]
    h = jnp.maximum(h, 0.0)                                              # ReLU (f32, VPU)
    h = jnp.dot(w2_ref[...], h.astype(jnp.bfloat16),
                preferred_element_type=jnp.float32) + b2_ref[...]
    h = jnp.maximum(h, 0.0)                                              # ReLU (f32, VPU)
    logits = jnp.dot(w3_ref[...], h.astype(jnp.bfloat16),
                     preferred_element_type=jnp.float32) + b3_ref[...]   # (n_cls, TB)

    # Numerically-stable softmax over the class rows (== dim=1 of the original
    # (B, n_cls) layout).  n_cls is tiny (3), so reduce with explicit VPU
    # maximum/adds over sublane rows rather than an XLU reduce.
    n_cls = logits.shape[0]
    m = logits[0:1, :]
    for r in range(1, n_cls):
        m = jnp.maximum(m, logits[r:r + 1, :])
    e = jnp.exp(logits - m)                                              # f32 EUP
    denom = e[0:1, :]
    for r in range(1, n_cls):
        denom = denom + e[r:r + 1, :]
    o_ref[...] = (e * pl.reciprocal(denom, approx=True)).astype(o_ref.dtype)


def _round_up(n, m):
    return ((n + m - 1) // m) * m


def _choose_batch_tile(batch):
    """Batch sits on the lane axis, so tiles are multiples of 128."""
    if batch <= 128:
        return 128
    if batch <= 4096:
        # At least 2 grid steps so the "parallel" batch axis can be split
        # across v7x's 2 TensorCores (free on single-TC v5e/v6e).
        return _round_up(pl.cdiv(batch, 2), 128)
    # Large batch: big tiles amortize per-grid-step overhead; a (50, 2048) f32
    # activation slab is only ~400 KiB, far inside any generation's VMEM.
    return 2048


def model_forward(x, params, *, batch_tile=None):
    """x: (B, D_in) f32; params: ((w1,b1),(w2,b2),(w3,b3)) with w stored (in, out)."""
    (w1, b1), (w2, b2), (w3, b3) = params
    batch, d_in = x.shape
    h1, h2, d_out = w1.shape[1], w2.shape[1], w3.shape[1]

    if batch_tile is None:
        batch_tile = _choose_batch_tile(batch)
    b_pad = _round_up(batch, batch_tile)
    grid = (b_pad // batch_tile,)

    # Feature-major input: batch on the lane axis, zero-padded to a multiple of
    # the tile (padded columns produce valid-but-discarded softmax columns).
    x_t = jnp.pad(x.T, ((0, 0), (0, b_pad - batch)))
    # Weights pre-transposed to (out, in) and cast to bf16 once (MXU-native);
    # biases stay f32 columns so all elementwise math stays f32.
    w1_t = w1.T.astype(jnp.bfloat16)
    w2_t = w2.T.astype(jnp.bfloat16)
    w3_t = w3.T.astype(jnp.bfloat16)
    b1_c = b1.reshape(h1, 1).astype(jnp.float32)
    b2_c = b2.reshape(h2, 1).astype(jnp.float32)
    b3_c = b3.reshape(d_out, 1).astype(jnp.float32)

    const_block = lambda i: (0, 0)  # resident across all grid steps (no re-DMA)

    out_t = pl.pallas_call(
        _mlp_softmax_kernel,
        out_shape=jax.ShapeDtypeStruct((d_out, b_pad), jnp.float32),
        grid=grid,
        in_specs=[
            pl.BlockSpec((d_in, batch_tile), lambda i: (0, i)),  # x tile
            pl.BlockSpec((h1, d_in), const_block),               # w1^T
            pl.BlockSpec((h1, 1), const_block),                  # b1
            pl.BlockSpec((h2, h1), const_block),                 # w2^T
            pl.BlockSpec((h2, 1), const_block),                  # b2
            pl.BlockSpec((d_out, h2), const_block),              # w3^T
            pl.BlockSpec((d_out, 1), const_block),               # b3
        ],
        out_specs=pl.BlockSpec((d_out, batch_tile), lambda i: (0, i)),
        compiler_params=pltpu.CompilerParams(
            dimension_semantics=("parallel",),
        ),
    )(x_t, w1_t, b1_c, w2_t, b2_c, w3_t, b3_c)

    # Back to the (B, n_cls) row-major layout of the PyTorch module.
    return out_t[:, :batch].T


def init_params(key, input_dim, hidden=50, n_out=3):
    """Mimic PyTorch nn.Linear default init: U(-1/sqrt(fan_in), 1/sqrt(fan_in)).
    Weights stored (in, out); the wrapper transposes/casts for the kernel."""
    def linear(k, fan_in, fan_out):
        kw, kb = jax.random.split(k)
        bound = 1.0 / jnp.sqrt(jnp.float32(fan_in))
        w = jax.random.uniform(kw, (fan_in, fan_out), jnp.float32, -bound, bound)
        b = jax.random.uniform(kb, (fan_out,), jnp.float32, -bound, bound)
        return w, b

    k1, k2, k3 = jax.random.split(key, 3)
    return (
        linear(k1, input_dim, hidden),
        linear(k2, hidden, hidden),
        linear(k3, hidden, n_out),
    )


def _reference_forward(x, params):
    (w1, b1), (w2, b2), (w3, b3) = params
    h = jax.nn.relu(x @ w1 + b1)
    h = jax.nn.relu(h @ w2 + b2)
    return jax.nn.softmax(h @ w3 + b3, axis=1)


if __name__ == "__main__":
    key = jax.random.PRNGKey(0)
    k_x, k_p, k_x2 = jax.random.split(key, 3)

    batch, input_dim = 8, 4  # small, deterministic example consistent with the module
    x = jax.random.normal(k_x, (batch, input_dim), dtype=jnp.float32)
    params = init_params(k_p, input_dim)

    out = jax.block_until_ready(model_forward(x, params))
    assert out.shape == (batch, 3)
    # approx reciprocal => rows sum to 1 within ~1e-3
    assert jnp.allclose(jnp.sum(out, axis=1), 1.0, atol=5e-3)
    ref = _reference_forward(x, params)
    # bf16 MXU operands => slightly looser tolerance vs the pure-f32 reference
    assert jnp.allclose(out, ref, atol=2e-2), float(jnp.max(jnp.abs(out - ref)))

    # Exercise the multi-step / padded-remainder path (batch=300 -> tile=256,
    # padded to 512, grid=(2,) so v7x can split across both TensorCores).
    x2 = jax.random.normal(k_x2, (300, input_dim), dtype=jnp.float32)
    out2 = jax.block_until_ready(model_forward(x2, params))
    assert out2.shape == (300, 3)
    assert jnp.allclose(jnp.sum(out2, axis=1), 1.0, atol=5e-3)
    ref2 = _reference_forward(x2, params)
    assert jnp.allclose(out2, ref2, atol=2e-2), float(jnp.max(jnp.abs(out2 - ref2)))

    print("KERNEL_OK")
</pallas_src>

<mosaic_0001>
module attributes {stable_mosaic.version = 11 : i64} {
  func.func @_mlp_softmax_kernel(%arg0: i32, %arg1: memref<4x128xf32, #tpu.memory_space<vmem>>, %arg2: memref<50x4xbf16, #tpu.memory_space<vmem>>, %arg3: memref<50x1xf32, #tpu.memory_space<vmem>>, %arg4: memref<50x50xbf16, #tpu.memory_space<vmem>>, %arg5: memref<50x1xf32, #tpu.memory_space<vmem>>, %arg6: memref<3x50xbf16, #tpu.memory_space<vmem>>, %arg7: memref<3x1xf32, #tpu.memory_space<vmem>>, %arg8: memref<3x128xf32, #tpu.memory_space<vmem>>) attributes {dimension_semantics = [#tpu.dimension_semantics<parallel>], iteration_bounds = array<i64: 1>, scalar_prefetch = 0 : i64, scratch_operands = 0 : i64, tpu.core_type = #tpu.core_type<tc>, window_params = [{transform_indices = @transform_0, window_bounds = array<i64: 4, 128>}, {pipeline_mode = #tpu.pipeline_mode<synchronous>, transform_indices = @transform_1, window_bounds = array<i64: 50, 4>}, {pipeline_mode = #tpu.pipeline_mode<synchronous>, transform_indices = @transform_2, window_bounds = array<i64: 50, 1>}, {pipeline_mode = #tpu.pipeline_mode<synchronous>, transform_indices = @transform_3, window_bounds = array<i64: 50, 50>}, {pipeline_mode = #tpu.pipeline_mode<synchronous>, transform_indices = @transform_4, window_bounds = array<i64: 50, 1>}, {pipeline_mode = #tpu.pipeline_mode<synchronous>, transform_indices = @transform_5, window_bounds = array<i64: 3, 50>}, {pipeline_mode = #tpu.pipeline_mode<synchronous>, transform_indices = @transform_6, window_bounds = array<i64: 3, 1>}, {transform_indices = @transform_7, window_bounds = array<i64: 3, 128>}]} {
    %c0 = arith.constant 0 : index
    %c0_0 = arith.constant 0 : index
    %0 = vector.load %arg1[%c0, %c0_0] : memref<4x128xf32, #tpu.memory_space<vmem>>, vector<4x128xf32>
    %1 = arith.truncf %0 : vector<4x128xf32> to vector<4x128xbf16>
    %c0_1 = arith.constant 0 : index
    %c0_2 = arith.constant 0 : index
    %2 = vector.load %arg2[%c0_1, %c0_2] : memref<50x4xbf16, #tpu.memory_space<vmem>>, vector<50x4xbf16>
    %cst = arith.constant dense<0.000000e+00> : vector<50x128xf32>
    %3 = tpu.matmul %2, %1, %cst {dimension_numbers = #tpu.dot_dimension_numbers<[1], [0], [0], [1], [0, 0, 1, 1], [], []>} : vector<50x4xbf16>, vector<4x128xbf16>, vector<50x128xf32> -> vector<50x128xf32>
    %c0_3 = arith.constant 0 : index
    %c0_4 = arith.constant 0 : index
    %4 = vector.load %arg3[%c0_3, %c0_4] : memref<50x1xf32, #tpu.memory_space<vmem>>, vector<50x1xf32>
    %5 = vector.broadcast %4 : vector<50x1xf32> to vector<50x128xf32>
    %6 = arith.addf %3, %5 : vector<50x128xf32>
    %cst_5 = arith.constant 0.000000e+00 : f32
    %7 = vector.broadcast %cst_5 : f32 to vector<50x128xf32>
    %8 = arith.maximumf %6, %7 : vector<50x128xf32>
    %c0_6 = arith.constant 0 : index
    %c0_7 = arith.constant 0 : index
    %9 = vector.load %arg4[%c0_6, %c0_7] : memref<50x50xbf16, #tpu.memory_space<vmem>>, vector<50x50xbf16>
    %10 = arith.truncf %8 : vector<50x128xf32> to vector<50x128xbf16>
    %cst_8 = arith.constant dense<0.000000e+00> : vector<50x128xf32>
    %11 = tpu.matmul %9, %10, %cst_8 {dimension_numbers = #tpu.dot_dimension_numbers<[1], [0], [0], [1], [0, 0, 1, 1], [], []>} : vector<50x50xbf16>, vector<50x128xbf16>, vector<50x128xf32> -> vector<50x128xf32>
    %c0_9 = arith.constant 0 : index
    %c0_10 = arith.constant 0 : index
    %12 = vector.load %arg5[%c0_9, %c0_10] : memref<50x1xf32, #tpu.memory_space<vmem>>, vector<50x1xf32>
    %13 = vector.broadcast %12 : vector<50x1xf32> to vector<50x128xf32>
    %14 = arith.addf %11, %13 : vector<50x128xf32>
    %cst_11 = arith.constant 0.000000e+00 : f32
    %15 = vector.broadcast %cst_11 : f32 to vector<50x128xf32>
    %16 = arith.maximumf %14, %15 : vector<50x128xf32>
    %c0_12 = arith.constant 0 : index
    %c0_13 = arith.constant 0 : index
    %17 = vector.load %arg6[%c0_12, %c0_13] : memref<3x50xbf16, #tpu.memory_space<vmem>>, vector<3x50xbf16>
    %18 = arith.truncf %16 : vector<50x128xf32> to vector<50x128xbf16>
    %cst_14 = arith.constant dense<0.000000e+00> : vector<3x128xf32>
    %19 = tpu.matmul %17, %18, %cst_14 {dimension_numbers = #tpu.dot_dimension_numbers<[1], [0], [0], [1], [0, 0, 1, 1], [], []>} : vector<3x50xbf16>, vector<50x128xbf16>, vector<3x128xf32> -> vector<3x128xf32>
    %c0_15 = arith.constant 0 : index
    %c0_16 = arith.constant 0 : index
    %20 = vector.load %arg7[%c0_15, %c0_16] : memref<3x1xf32, #tpu.memory_space<vmem>>, vector<3x1xf32>
    %21 = vector.broadcast %20 : vector<3x1xf32> to vector<3x128xf32>
    %22 = arith.addf %19, %21 : vector<3x128xf32>
    %23 = vector.extract_strided_slice %22 {offsets = [0, 0], sizes = [1, 128], strides = [1, 1]} : vector<3x128xf32> to vector<1x128xf32>
    %24 = vector.extract_strided_slice %22 {offsets = [1, 0], sizes = [1, 128], strides = [1, 1]} : vector<3x128xf32> to vector<1x128xf32>
    %25 = arith.maximumf %23, %24 : vector<1x128xf32>
    %26 = vector.extract_strided_slice %22 {offsets = [2, 0], sizes = [1, 128], strides = [1, 1]} : vector<3x128xf32> to vector<1x128xf32>
    %27 = arith.maximumf %25, %26 : vector<1x128xf32>
    %28 = vector.broadcast %27 : vector<1x128xf32> to vector<3x128xf32>
    %29 = arith.subf %22, %28 : vector<3x128xf32>
    %30 = math.exp %29 : vector<3x128xf32>
    %31 = vector.extract_strided_slice %30 {offsets = [0, 0], sizes = [1, 128], strides = [1, 1]} : vector<3x128xf32> to vector<1x128xf32>
    %32 = vector.extract_strided_slice %30 {offsets = [1, 0], sizes = [1, 128], strides = [1, 1]} : vector<3x128xf32> to vector<1x128xf32>
    %33 = arith.addf %31, %32 : vector<1x128xf32>
    %34 = vector.extract_strided_slice %30 {offsets = [2, 0], sizes = [1, 128], strides = [1, 1]} : vector<3x128xf32> to vector<1x128xf32>
    %35 = arith.addf %33, %34 : vector<1x128xf32>
    %36 = tpu.reciprocal %35 {approx = true} : vector<1x128xf32> -> vector<1x128xf32>
    %37 = vector.broadcast %36 : vector<1x128xf32> to vector<3x128xf32>
    %38 = arith.mulf %30, %37 : vector<3x128xf32>
    %c0_17 = arith.constant 0 : index
    %c0_18 = arith.constant 0 : index
    %39 = vector.load %arg8[%c0_17, %c0_18] : memref<3x128xf32, #tpu.memory_space<vmem>>, vector<3x128xf32>
    tpu.vector_store %arg8[%c0_17, %c0_18], %38 {strides = array<i32>} : memref<3x128xf32, #tpu.memory_space<vmem>>, vector<3x128xf32>,
    return
  }
  func.func @transform_0(%arg0: i32) -> (i32, i32) {
    %c0_i32 = arith.constant 0 : i32
    %c0_i32_0 = arith.constant 0 : i32
    return %c0_i32, %arg0 : i32, i32
  }
  func.func @transform_1(%arg0: i32) -> (i32, i32) {
    %c0_i32 = arith.constant 0 : i32
    %c0_i32_0 = arith.constant 0 : i32
    %c0_i32_1 = arith.constant 0 : i32
    return %c0_i32, %c0_i32_0 : i32, i32
  }
  func.func @transform_2(%arg0: i32) -> (i32, i32) {
    %c0_i32 = arith.constant 0 : i32
    %c0_i32_0 = arith.constant 0 : i32
    %c0_i32_1 = arith.constant 0 : i32
    return %c0_i32, %c0_i32_0 : i32, i32
  }
  func.func @transform_3(%arg0: i32) -> (i32, i32) {
    %c0_i32 = arith.constant 0 : i32
    %c0_i32_0 = arith.constant 0 : i32
    %c0_i32_1 = arith.constant 0 : i32
    return %c0_i32, %c0_i32_0 : i32, i32
  }
  func.func @transform_4(%arg0: i32) -> (i32, i32) {
    %c0_i32 = arith.constant 0 : i32
    %c0_i32_0 = arith.constant 0 : i32
    %c0_i32_1 = arith.constant 0 : i32
    return %c0_i32, %c0_i32_0 : i32, i32
  }
  func.func @transform_5(%arg0: i32) -> (i32, i32) {
    %c0_i32 = arith.constant 0 : i32
    %c0_i32_0 = arith.constant 0 : i32
    %c0_i32_1 = arith.constant 0 : i32
    return %c0_i32, %c0_i32_0 : i32, i32
  }
  func.func @transform_6(%arg0: i32) -> (i32, i32) {
    %c0_i32 = arith.constant 0 : i32
    %c0_i32_0 = arith.constant 0 : i32
    %c0_i32_1 = arith.constant 0 : i32
    return %c0_i32, %c0_i32_0 : i32, i32
  }
  func.func @transform_7(%arg0: i32) -> (i32, i32) {
    %c0_i32 = arith.constant 0 : i32
    %c0_i32_0 = arith.constant 0 : i32
    return %c0_i32, %arg0 : i32, i32
  }
}

</mosaic_0001>

<llo_original>
// kernel: tpu_custom_call.1
$region0: #{tpu_custom_call.1}
  #allocation0 [shape = 'u32[]', space=smem, size = 0x4, offset = 0x4, fixed_abs, tag = 'smem constant byte address 0x4 - core index']
  #allocation1 [shape = 'u32[144,128]{1,0:T(1,128)}', space=vmem, size = 0x12000, scoped, tag = 'internal scratch']
  %s0 = inlined_call_operand.vmem [shape: f32[4,128], index: 0, kind: input, shape index: {}]
  %s1 = inlined_call_operand.vmem [shape: bf16[50,4], index: 1, kind: input, shape index: {}]
  %s2 = inlined_call_operand.vmem [shape: f32[50,1], index: 2, kind: input, shape index: {}]
  %s3 = inlined_call_operand.vmem [shape: bf16[50,50], index: 3, kind: input, shape index: {}]
  %s4 = inlined_call_operand.vmem [shape: f32[50,1], index: 4, kind: input, shape index: {}]
  %s5 = inlined_call_operand.vmem [shape: bf16[3,50], index: 5, kind: input, shape index: {}]
  %s6 = inlined_call_operand.vmem [shape: f32[3,1], index: 6, kind: input, shape index: {}]
  %s7 = inlined_call_operand.hbm [shape: f32[3,128], index: 7, kind: output, shape index: {}]
  %s8 = sld [smem:[#allocation0]]
  $region38: #{tpu_custom_call.1} parent=0
    _
  %s10 = ssub.s32 1, %s8
  %s11 = scalar_select 0, %s10, %s8
  $region1: #{tpu_custom_call.1} parent=0
    #allocation2 [shape = 'u8[2048]{0}', space=vmem, size = 0x800, scoped, tag = 'output window, operand 0, single buffered']
    #allocation3 [shape = 's32[1]{0}', space=sflag, size = 0x4, scoped, tag = 'scoped memory for tpu_custom_call.1']
    %12 = vsyncpa [#allocation3], 0
    // Predicated region
    $region2: #{tpu_custom_call.1} parent=1 // pred_check
      _
    $region3: #{tpu_custom_call.1} parent=1 // pred_check_branch
      %14 = sbr.rel (0) target = $region5
    $region4: #{tpu_custom_call.1} parent=1 // pred_region
      _
    $region5: #{tpu_custom_call.1} parent=1 // pred_fallthru
      _
    // Predicated region
    $region6: #{tpu_custom_call.1} parent=1 // pred_check
      _
    $region7: #{tpu_custom_call.1} parent=1 // pred_check_branch
      %16 = sbr.rel (0) target = $region9
    $region8: #{tpu_custom_call.1} parent=1 // pred_region
      _
    $region9: #{tpu_custom_call.1} parent=1 // pred_fallthru
      _
    // Predicated region
    $region10: #{tpu_custom_call.1} parent=1 // pred_check
      _
    $region11: #{tpu_custom_call.1} parent=1 // pred_check_branch
      %18 = sbr.rel (0) target = $region13
    $region12: #{tpu_custom_call.1} parent=1 // pred_region
      _
    $region13: #{tpu_custom_call.1} parent=1 // pred_fallthru
      _
    // Predicated region
    $region14: #{tpu_custom_call.1} parent=1 // pred_check
      _
    $region15: #{tpu_custom_call.1} parent=1 // pred_check_branch
      %20 = sbr.rel (0) target = $region17
    $region16: #{tpu_custom_call.1} parent=1 // pred_region
      _
    $region17: #{tpu_custom_call.1} parent=1 // pred_fallthru
      _
    // Predicated region
    $region18: #{tpu_custom_call.1} parent=1 // pred_check
      _
    $region19: #{tpu_custom_call.1} parent=1 // pred_check_branch
      %22 = sbr.rel (0) target = $region21
    $region20: #{tpu_custom_call.1} parent=1 // pred_region
      _
    $region21: #{tpu_custom_call.1} parent=1 // pred_fallthru
      _
    // Predicated region
    $region22: #{tpu_custom_call.1} parent=1 // pred_check
      _
    $region23: #{tpu_custom_call.1} parent=1 // pred_check_branch
      %24 = sbr.rel (0) target = $region25
    $region24: #{tpu_custom_call.1} parent=1 // pred_region
      _
    $region25: #{tpu_custom_call.1} parent=1 // pred_fallthru
      _
    // Predicated region
    $region26: #{tpu_custom_call.1} parent=1 // pred_check
      _
    $region27: #{tpu_custom_call.1} parent=1 // pred_check_branch
      %26 = sbr.rel (0) target = $region29
    $region28: #{tpu_custom_call.1} parent=1 // pred_region
      _
    $region29: #{tpu_custom_call.1} parent=1 // pred_fallthru
      _
    %v28 = vld [vmem:[%s0] sm:$0xf]
    %v29 = vpack.c.bf16 %v28, %v28
    %v30 = vld [vmem:[%s1] sm:$0xf]
    %v31 = vld [vmem:[%s1 + $0x4] sm:$0xf]
    %v32 = vld [vmem:[%s1 + $0x8] sm:$0xf]
    %v33 = vld [vmem:[%s1 + $0xc] sm:$0xf]
    %v34 = vld [vmem:[%s1 + $0x10] sm:$0xf]
    %v35 = vld [vmem:[%s1 + $0x14] sm:$0xf]
    %v36 = vld [vmem:[%s1 + $0x18] sm:$0x1]
    %v37 = vld [vmem:[%s2] sm:$0xff]
    %v38 = vld [vmem:[%s2 + $0x8] sm:$0xff]
    %v39 = vld [vmem:[%s2 + $0x10] sm:$0xff]
    %v40 = vld [vmem:[%s2 + $0x18] sm:$0xff]
    %v41 = vld [vmem:[%s2 + $0x20] sm:$0xff]
    %v42 = vld [vmem:[%s2 + $0x28] sm:$0xff]
    %v43 = vld [vmem:[%s2 + $0x30] sm:$0x3]
    %45 = vset.pattern.permute.xlu0 0
    %46 = vperm.xlu0 %45, %v37
    %v47 = vpop.permute.xlu0 %46
    %50 = vset.pattern.permute.xlu0 0
    %51 = vperm.xlu0 %50, %v38
    %v52 = vpop.permute.xlu0 %51
    %55 = vset.pattern.permute.xlu0 0
    %56 = vperm.xlu0 %55, %v39
    %v57 = vpop.permute.xlu0 %56
    %60 = vset.pattern.permute.xlu0 0
    %61 = vperm.xlu0 %60, %v40
    %v62 = vpop.permute.xlu0 %61
    %65 = vset.pattern.permute.xlu0 0
    %66 = vperm.xlu0 %65, %v41
    %v67 = vpop.permute.xlu0 %66
    %70 = vset.pattern.permute.xlu0 0
    %71 = vperm.xlu0 %70, %v42
    %v72 = vpop.permute.xlu0 %71
    %75 = vset.pattern.permute.xlu0 0
    %76 = vperm.xlu0 %75, %v43
    %v77 = vpop.permute.xlu0 %76
    %v86 = vunpack.c.l.b16 %v30
    %v87 = vunpack.c.l.b16 %v31
    %v88 = vunpack.c.l.b16 %v32
    %v89 = vunpack.c.l.b16 %v33
    %v90 = vunpack.c.l.b16 %v34
    %v91 = vunpack.c.l.b16 %v35
    %v92 = vunpack.c.l.b16 %v36
    %v93 = vpack.c.b16 %v87, %v86
    %v94 = vpack.c.b16 %v89, %v88
    %v95 = vpack.c.b16 %v91, %v90
    %v96 = vpack.c.b16 %v92, %v92
    %vm97 = vcmask 31744
    %v99 = vsel %vm97, %v93, 0
    %v102 = vsel %vm97, %v94, 0
    %v105 = vsel %vm97, %v95, 0
    %v108 = vsel %vm97, %v96, 0
    %vm110 = vcmask 1041408
    %v112 = vsel %vm110, %v29, 0
    %114 = vmatprep.subr.bf16.mxu0 0
    %115 = vmatpush1.bf16.msra.mxu0 0
    %116 = vmatprep.subr.bf16.mxu0 0
    %117 = vmatpush1.bf16.msra.mxu0 0
    %118 = vmatprep.subr.bf16.mxu0 0
    %119 = vmatpush1.bf16.msra.mxu0 0
    %120 = vmatprep.subr.bf16.mxu0 0
    %121 = vmatpush1.bf16.msra.mxu0 0
    %122 = vmatprep.subr.bf16.mxu0 0
    %123 = vmatpush1.bf16.msra.mxu0 0
    %124 = vmatprep.subr.bf16.mxu0 0
    %125 = vmatpush1.bf16.msra.mxu0 0
    %126 = vmatprep.subr.bf16.mxu0 0
    %127 = vmatpush1.bf16.msra.mxu0 0
    %128 = vmatprep.subr.bf16.mxu0 0
    %129 = vmatpush1.bf16.msra.mxu0 %v112
    %130 = vmatprep.subr.bf16.mxu0 0
    %131 = vmatpush2.bf16.msra.mxu0 0
    %132 = vmatprep.subr.bf16.mxu0 0
    %133 = vmatpush2.bf16.msra.mxu0 0
    %134 = vmatprep.subr.bf16.mxu0 0
    %135 = vmatpush2.bf16.msra.mxu0 0
    %136 = vmatprep.subr.bf16.mxu0 0
    %137 = vmatpush2.bf16.msra.mxu0 0
    %138 = vmatprep.subr.bf16.mxu0 0
    %139 = vmatpush2.bf16.msra.mxu0 0
    %140 = vmatprep.subr.bf16.mxu0 0
    %141 = vmatpush2.bf16.msra.mxu0 0
    %142 = vmatprep.subr.bf16.mxu0 0
    %143 = vmatpush2.bf16.msra.mxu0 0
    %144 = vmatprep.subr.bf16.mxu0 0
    %145 = vmatpush2.bf16.msra.mxu0 0
    %146 = vmatprep.mubr.bf16.mxu0 0
    %147 = vmatmul.mubr.bf16.gmra.mxu0 %v99
    %v148 = vpop.f32.mrf.mxu0
    %v149 = vadd.f32 %v47, %v148
    %v150 = vpop.f32.mrf.mxu0
    %v151 = vpop.f32.mrf.mxu0
    %v152 = vadd.f32 %v52, %v151
    %v153 = vpop.f32.mrf.mxu0
    %154 = vmatprep.mubr.bf16.mxu0 0
    %155 = vmatmul.mubr.bf16.gmra.mxu0 %v102
    %v156 = vpop.f32.mrf.mxu0
    %v157 = vadd.f32 %v57, %v156
    %v158 = vpop.f32.mrf.mxu0
    %v159 = vpop.f32.mrf.mxu0
    %v160 = vadd.f32 %v62, %v159
    %v161 = vpop.f32.mrf.mxu0
    %162 = vmatprep.mubr.bf16.mxu0 0
    %163 = vmatmul.mubr.bf16.gmra.mxu0 %v105
    %v164 = vpop.f32.mrf.mxu0
    %v165 = vadd.f32 %v67, %v164
    %v166 = vpop.f32.mrf.mxu0
    %v167 = vpop.f32.mrf.mxu0
    %v168 = vadd.f32 %v72, %v167
    %v169 = vpop.f32.mrf.mxu0
    %170 = vmatprep.mubr.bf16.mxu0 0
    %171 = vmatmul.mubr.bf16.gmra.mxu0 %v108
    %v172 = vpop.f32.mrf.mxu0
    %v173 = vadd.f32 %v77, %v172
    %v174 = vpop.f32.mrf.mxu0
    %v175 = vpop.f32.mrf.mxu0
    %v176 = vpop.f32.mrf.mxu0
    %177 = vdwg.mxu0
    %v178 = vmax.f32 %v149, 0.0
    %v179 = vmax.f32 %v152, 0.0
    %v180 = vmax.f32 %v157, 0.0
    %v181 = vmax.f32 %v160, 0.0
    %v182 = vmax.f32 %v165, 0.0
    %v183 = vmax.f32 %v168, 0.0
    %v184 = vmax.f32 %v173, 0.0
    %v185 = vld [vmem:[%s3] sm:$0xf]
    %v186 = vld [vmem:[%s3 + $0x4] sm:$0xf]
    %v187 = vld [vmem:[%s3 + $0x8] sm:$0xf]
    %v188 = vld [vmem:[%s3 + $0xc] sm:$0xf]
    %v189 = vld [vmem:[%s3 + $0x10] sm:$0xf]
    %v190 = vld [vmem:[%s3 + $0x14] sm:$0xf]
    %v191 = vld [vmem:[%s3 + $0x18] sm:$0x1]
    %v192 = vpack.c.bf16 %v179, %v178
    %v193 = vpack.c.bf16 %v181, %v180
    %v194 = vpack.c.bf16 %v183, %v182
    %v195 = vpack.c.bf16 %v184, %v184
    %v196 = vld [vmem:[%s4] sm:$0xff]
    %v197 = vld [vmem:[%s4 + $0x8] sm:$0xff]
    %v198 = vld [vmem:[%s4 + $0x10] sm:$0xff]
    %v199 = vld [vmem:[%s4 + $0x18] sm:$0xff]
    %v200 = vld [vmem:[%s4 + $0x20] sm:$0xff]
    %v201 = vld [vmem:[%s4 + $0x28] sm:$0xff]
    %v202 = vld [vmem:[%s4 + $0x30] sm:$0x3]
    %204 = vset.pattern.permute.xlu0 0
    %205 = vperm.xlu0 %204, %v196
    %v206 = vpop.permute.xlu0 %205
    %209 = vset.pattern.permute.xlu0 0
    %210 = vperm.xlu0 %209, %v197
    %v211 = vpop.permute.xlu0 %210
    %214 = vset.pattern.permute.xlu0 0
    %215 = vperm.xlu0 %214, %v198
    %v216 = vpop.permute.xlu0 %215
    %219 = vset.pattern.permute.xlu0 0
    %220 = vperm.xlu0 %219, %v199
    %v221 = vpop.permute.xlu0 %220
    %224 = vset.pattern.permute.xlu0 0
    %225 = vperm.xlu0 %224, %v200
    %v226 = vpop.permute.xlu0 %225
    %229 = vset.pattern.permute.xlu0 0
    %230 = vperm.xlu0 %229, %v201
    %v231 = vpop.permute.xlu0 %230
    %234 = vset.pattern.permute.xlu0 0
    %235 = vperm.xlu0 %234, %v202
    %v236 = vpop.permute.xlu0 %235
    %v245 = vunpack.c.l.b16 %v185
    %v246 = vunpack.c.l.b16 %v186
    %v247 = vunpack.c.l.b16 %v187
    %v248 = vunpack.c.l.b16 %v188
    %v249 = vunpack.c.l.b16 %v189
    %v250 = vunpack.c.l.b16 %v190
    %v251 = vunpack.c.l.b16 %v191
    %v252 = vpack.c.b16 %v246, %v245
    %v253 = vpack.c.b16 %v248, %v247
    %v254 = vpack.c.b16 %v250, %v249
    %v255 = vpack.c.b16 %v251, %v251
    %vm256 = vcmask 408576
    %v258 = vsel %vm256, %v252, 0
    %v261 = vsel %vm256, %v253, 0
    %v264 = vsel %vm256, %v254, 0
    %v267 = vsel %vm256, %v255, 0
    %vm269 = vcmask 1040384
    %v271 = vsel %vm269, %v195, 0
    %273 = vmatprep.subr.bf16.mxu0 0
    %274 = vmatpush1.bf16.msra.mxu0 0
    %275 = vmatprep.subr.bf16.mxu0 0
    %276 = vmatpush1.bf16.msra.mxu0 0
    %277 = vmatprep.subr.bf16.mxu0 0
    %278 = vmatpush1.bf16.msra.mxu0 0
    %279 = vmatprep.subr.bf16.mxu0 0
    %280 = vmatpush1.bf16.msra.mxu0 0
    %281 = vmatprep.subr.bf16.mxu0 0
    %282 = vmatpush1.bf16.msra.mxu0 %v271
    %283 = vmatprep.subr.bf16.mxu0 0
    %284 = vmatpush1.bf16.msra.mxu0 %v194
    %285 = vmatprep.subr.bf16.mxu0 0
    %286 = vmatpush1.bf16.msra.mxu0 %v193
    %287 = vmatprep.subr.bf16.mxu0 0
    %288 = vmatpush1.bf16.msra.mxu0 %v192
    %289 = vmatprep.subr.bf16.mxu0 0
    %290 = vmatpush2.bf16.msra.mxu0 0
    %291 = vmatprep.subr.bf16.mxu0 0
    %292 = vmatpush2.bf16.msra.mxu0 0
    %293 = vmatprep.subr.bf16.mxu0 0
    %294 = vmatpush2.bf16.msra.mxu0 0
    %295 = vmatprep.subr.bf16.mxu0 0
    %296 = vmatpush2.bf16.msra.mxu0 0
    %297 = vmatprep.subr.bf16.mxu0 0
    %298 = vmatpush2.bf16.msra.mxu0 0
    %299 = vmatprep.subr.bf16.mxu0 0
    %300 = vmatpush2.bf16.msra.mxu0 0
    %301 = vmatprep.subr.bf16.mxu0 0
    %302 = vmatpush2.bf16.msra.mxu0 0
    %303 = vmatprep.subr.bf16.mxu0 0
    %304 = vmatpush2.bf16.msra.mxu0 0
    %305 = vmatprep.mubr.bf16.mxu0 0
    %306 = vmatmul.mubr.bf16.gmra.mxu0 %v258
    %v307 = vpop.f32.mrf.mxu0
    %v308 = vadd.f32 %v206, %v307
    %v309 = vpop.f32.mrf.mxu0
    %v310 = vpop.f32.mrf.mxu0
    %v311 = vadd.f32 %v211, %v310
    %v312 = vpop.f32.mrf.mxu0
    %313 = vmatprep.mubr.bf16.mxu0 0
    %314 = vmatmul.mubr.bf16.gmra.mxu0 %v261
    %v315 = vpop.f32.mrf.mxu0
    %v316 = vadd.f32 %v216, %v315
    %v317 = vpop.f32.mrf.mxu0
    %v318 = vpop.f32.mrf.mxu0
    %v319 = vadd.f32 %v221, %v318
    %v320 = vpop.f32.mrf.mxu0
    %321 = vmatprep.mubr.bf16.mxu0 0
    %322 = vmatmul.mubr.bf16.gmra.mxu0 %v264
    %v323 = vpop.f32.mrf.mxu0
    %v324 = vadd.f32 %v226, %v323
    %v325 = vpop.f32.mrf.mxu0
    %v326 = vpop.f32.mrf.mxu0
    %v327 = vadd.f32 %v231, %v326
    %v328 = vpop.f32.mrf.mxu0
    %329 = vmatprep.mubr.bf16.mxu0 0
    %330 = vmatmul.mubr.bf16.gmra.mxu0 %v267
    %v331 = vpop.f32.mrf.mxu0
    %v332 = vadd.f32 %v236, %v331
    %v333 = vpop.f32.mrf.mxu0
    %v334 = vpop.f32.mrf.mxu0
    %v335 = vpop.f32.mrf.mxu0
    %336 = vdwg.mxu0
    %v337 = vmax.f32 %v308, 0.0
    %v338 = vmax.f32 %v311, 0.0
    %v339 = vmax.f32 %v316, 0.0
    %v340 = vmax.f32 %v319, 0.0
    %v341 = vmax.f32 %v324, 0.0
    %v342 = vmax.f32 %v327, 0.0
    %v343 = vmax.f32 %v332, 0.0
    %v344 = vld [vmem:[%s5] sm:$0x3]
    %v345 = vpack.c.bf16 %v338, %v337
    %v346 = vpack.c.bf16 %v340, %v339
    %v347 = vpack.c.bf16 %v342, %v341
    %v348 = vpack.c.bf16 %v343, %v343
    %v349 = vld [vmem:[%s6] sm:$0x7]
    %351 = vset.pattern.permute.xlu0 0
    %352 = vperm.xlu0 %351, %v349
    %v353 = vpop.permute.xlu0 %352
    %v356 = vsel %vm256, %v344, 0
    %v359 = vsel %vm269, %v348, 0
    %361 = vmatprep.subr.bf16.mxu0 0
    %362 = vmatpush1.bf16.msra.mxu0 0
    %363 = vmatprep.subr.bf16.mxu0 0
    %364 = vmatpush1.bf16.msra.mxu0 0
    %365 = vmatprep.subr.bf16.mxu0 0
    %366 = vmatpush1.bf16.msra.mxu0 0
    %367 = vmatprep.subr.bf16.mxu0 0
    %368 = vmatpush1.bf16.msra.mxu0 0
    %369 = vmatprep.subr.bf16.mxu0 0
    %370 = vmatpush1.bf16.msra.mxu0 %v359
    %371 = vmatprep.subr.bf16.mxu0 0
    %372 = vmatpush1.bf16.msra.mxu0 %v347
    %373 = vmatprep.subr.bf16.mxu0 0
    %374 = vmatpush1.bf16.msra.mxu0 %v346
    %375 = vmatprep.subr.bf16.mxu0 0
    %376 = vmatpush1.bf16.msra.mxu0 %v345
    %377 = vmatprep.subr.bf16.mxu0 0
    %378 = vmatpush2.bf16.msra.mxu0 0
    %379 = vmatprep.subr.bf16.mxu0 0
    %380 = vmatpush2.bf16.msra.mxu0 0
    %381 = vmatprep.subr.bf16.mxu0 0
    %382 = vmatpush2.bf16.msra.mxu0 0
    %383 = vmatprep.subr.bf16.mxu0 0
    %384 = vmatpush2.bf16.msra.mxu0 0
    %385 = vmatprep.subr.bf16.mxu0 0
    %386 = vmatpush2.bf16.msra.mxu0 0
    %387 = vmatprep.subr.bf16.mxu0 0
    %388 = vmatpush2.bf16.msra.mxu0 0
    %389 = vmatprep.subr.bf16.mxu0 0
    %390 = vmatpush2.bf16.msra.mxu0 0
    %391 = vmatprep.subr.bf16.mxu0 0
    %392 = vmatpush2.bf16.msra.mxu0 0
    %393 = vmatprep.mubr.bf16.mxu0 0
    %394 = vmatmul.mubr.bf16.gmra.mxu0 %v356
    %v395 = vpop.f32.mrf.mxu0
    %v396 = vadd.f32 %v353, %v395
    %v397 = vpop.f32.mrf.mxu0
    %v398 = vpop.f32.mrf.mxu0
    %v399 = vpop.f32.mrf.mxu0
    %400 = vdwg.mxu0
    %v402 = vrot.slane %v396, 1
    %v404 = vmax.f32 %v396, %v402
    %v405 = vrot.slane %v396, 2
    %v407 = vmax.f32 %v404, %v405
    %v408 = vlaneseq
    %v409 = vshrl.u32 %v408, 7
    %v410 = vsub.s32 0, %v409
    %v411 = vrot.slane %v407, %v410
    %v412 = vsub.f32 %v396, %v411
    %v413 = vmul.f32 %v412, 1.442695
    %v414 = vpow.pop %v413
    %v416 = vrot.slane %v414, 1
    %v418 = vadd.f32 %v414, %v416
    %v419 = vrot.slane %v414, 2
    %v421 = vadd.f32 %v418, %v419
    %v422 = vrcp.pop %v421
    %v423 = vlaneseq
    %v424 = vshrl.u32 %v423, 7
    %v425 = vsub.s32 0, %v424
    %v426 = vrot.slane %v422, %v425
    %v427 = vmul.f32 %v414, %v426
    %428 = vst [vmem:[#allocation2] sm:$0x7] %v427
    // Predicated region
    $region30: #{tpu_custom_call.1} parent=1 // pred_check
      _
    $region31: #{tpu_custom_call.1} parent=1 // pred_check_branch
      %430 = sbr.rel (0) target = $region33
    $region32: #{tpu_custom_call.1} parent=1 // pred_region
      %s432 = ssub.s32 64, 64
      %433 = vsyncadd [#allocation3], %s432
      %s435 = sshll.u32 [#allocation2], 4
      %s436 = int_to_ptr.vmem [resolvable:$true] %s435
      %438 = dma.vmem_to_hbm [thread:$0]  %s436, 64, %s7, [#allocation3]
    $region33: #{tpu_custom_call.1} parent=1 // pred_fallthru
      _
    // Predicated region
    $region34: #{tpu_custom_call.1} parent=1 // pred_check
      _
    $region35: #{tpu_custom_call.1} parent=1 // pred_check_branch
      %440 = sbr.rel (0) target = $region37
    $region36: #{tpu_custom_call.1} parent=1 // pred_region
      %441 = dma.done [#allocation3], 64
    $region37: #{tpu_custom_call.1} parent=1 // pred_fallthru
      _
    %442 = vsyncpa [#allocation3], 1

</llo_original>
